<compile_context>
chip_gen: v6e
topology: v6e:2x2x1
jax: 0.10.0
libtpu: 0.0.40
codegen_flags: <defaults>
</compile_context>

<pallas_src>
import numpy as np
import jax
import jax.numpy as jnp
from jax.experimental import pallas as pl
from jax.experimental.pallas import tpu as pltpu


def _round_up(x, m):
    return ((x + m - 1) // m) * m


def _pow2_floor(x):
    return 1 << (int(x).bit_length() - 1)


def _fold_rows_to_8(d):
    # (R, Dp) -> (8, Dp) sublane partial sums; R is a power of two >= 8.
    # Log-depth tree of static slices keeps the emitted IR small even for big tiles.
    r = d.shape[0]
    while r > 8:
        half = r // 2
        d = d[:half, :] + d[half:, :]
        r = half
    return d


def _l2_fused_kernel(x_ref, sid_row_ref, seg_sum_ref, sq_ref):
    # x_ref:       (TB, Dp) f32   row tile of inputs
    # sid_row_ref: (1, TB)  i32   segment id per row (S for padded rows)
    # seg_sum_ref: (S, Dp)  f32   resident per-segment column sums
    # sq_ref:      (8, Dp)  f32   resident lane-dense sum-of-squares partials
    t = pl.program_id(0)

    @pl.when(t == 0)
    def _init():
        seg_sum_ref[...] = jnp.zeros_like(seg_sum_ref)
        sq_ref[...] = jnp.zeros_like(sq_ref)

    x = x_ref[...]
    S = seg_sum_ref.shape[0]
    sid = sid_row_ref[...]                                     # (1, TB)
    seg = jax.lax.broadcasted_iota(jnp.int32, (S, 1), 0)       # (S, 1)
    onehot_t = (seg == sid).astype(jnp.float32)                # (S, TB)
    # Segment column sums via MXU: (S, TB) @ (TB, Dp) -> (S, Dp)
    seg_sum_ref[...] += jnp.dot(onehot_t, x, preferred_element_type=jnp.float32)
    # Total sum of squares, folded to an (8, Dp) lane-dense accumulator (VPU).
    sq_ref[...] += _fold_rows_to_8(x * x)


def _seg_mean_kernel(x_ref, sid_row_ref, invlen_ref, means_ref):
    # Pass 1 of the L1 path: per-segment means.
    t = pl.program_id(0)

    @pl.when(t == 0)
    def _init():
        means_ref[...] = jnp.zeros_like(means_ref)

    S = means_ref.shape[0]
    sid = sid_row_ref[...]                                     # (1, TB)
    seg = jax.lax.broadcasted_iota(jnp.int32, (S, 1), 0)       # (S, 1)
    onehot_t = (seg == sid).astype(jnp.float32)                # (S, TB)
    means_ref[...] += jnp.dot(onehot_t, x_ref[...],
                              preferred_element_type=jnp.float32)

    @pl.when(t == pl.num_programs(0) - 1)
    def _finalize():
        means_ref[...] = means_ref[...] * invlen_ref[...]      # sums -> means


def _l1_partials_kernel(x_ref, sid_col_ref, means_ref, part_ref):
    # Pass 2 of the L1 path: lane-dense per-tile |mean - x| partial sums.
    S = means_ref.shape[0]
    sid = sid_col_ref[...]                                     # (TB, 1)
    lane = jax.lax.broadcasted_iota(jnp.int32, (1, S), 1)      # (1, S)
    onehot = (sid == lane).astype(jnp.float32)                 # (TB, S)
    # Broadcast segment means back to rows: (TB, S) @ (S, Dp) -> (TB, Dp)
    mb = jnp.dot(onehot, means_ref[...], preferred_element_type=jnp.float32)
    part_ref[...] = _fold_rows_to_8(jnp.abs(mb - x_ref[...]))  # padded rows -> 0


def mid_loss(inputs, lengths, loss_type="L2"):
    """Pallas implementation of MidLoss.forward.

    inputs : (N, ...) float array; trailing dims are flattened (N rows total).
    lengths: static Python ints summing to N (as torch.split's list argument).
    Returns scalar f32 loss.
    """
    if loss_type not in ("L2", "L1"):
        raise AttributeError(loss_type)
    lengths = tuple(int(l) for l in lengths)
    S = len(lengths)
    N = sum(lengths)
    assert inputs.shape[0] == N, "lengths must sum to inputs.shape[0]"

    x = jnp.asarray(inputs, jnp.float32).reshape(N, -1)
    D = x.shape[1]
    D_pad = _round_up(D, 128)                       # lane-dense layout

    # Row-tile size: power of two in [128, 4096], x tile <= ~4 MiB, and no
    # larger than needed to cover N (avoids pure-padding work at tiny N).
    rows_cap = max(128, (4 * 1024 * 1024) // (4 * D_pad))
    TB = max(128, min(4096, _pow2_floor(rows_cap)))
    TB = min(TB, max(128, pl.next_power_of_2(N)))
    N_pad = _round_up(N, TB)
    n_tiles = N_pad // TB

    # Padded inputs and segment-id vectors (padded rows get id = S -> zero one-hot).
    x_p = jnp.zeros((N_pad, D_pad), jnp.float32).at[:N, :D].set(x)
    seg_ids = np.repeat(np.arange(S, dtype=np.int32), lengths)
    seg_ids = np.concatenate([seg_ids, np.full((N_pad - N,), S, np.int32)])
    sid_row = jnp.asarray(seg_ids).reshape(1, N_pad)
    invlen = jnp.asarray(1.0 / np.asarray(lengths, np.float64),
                         jnp.float32).reshape(S, 1)

    if loss_type == "L2":
        # Single pass: per-segment column sums + total sum of squares.
        seg_sums, sq_part = pl.pallas_call(
            _l2_fused_kernel,
            out_shape=(jax.ShapeDtypeStruct((S, D_pad), jnp.float32),
                       jax.ShapeDtypeStruct((8, D_pad), jnp.float32)),
            grid_spec=pltpu.PrefetchScalarGridSpec(
                num_scalar_prefetch=0,
                grid=(n_tiles,),
                in_specs=[
                    pl.BlockSpec((TB, D_pad), lambda t: (t, 0)),   # x tile
                    pl.BlockSpec((1, TB), lambda t: (0, t)),       # segment ids (row)
                ],
                out_specs=(pl.BlockSpec((S, D_pad), lambda t: (0, 0)),
                           pl.BlockSpec((8, D_pad), lambda t: (0, 0))),
            ),
            compiler_params=pltpu.CompilerParams(
                dimension_semantics=("arbitrary",)),
        )(x_p, sid_row)
        # sum_i (x_i - m)^2 = sum_i x_i^2 - (sum_i x_i)^2 / L  (per segment, per col)
        within = jnp.sum(sq_part) - jnp.sum(seg_sums * seg_sums * invlen)
        return within / (N * D)

    # ---------------- L1 path (needs the means explicitly) ----------------
    sid_col = jnp.asarray(seg_ids).reshape(N_pad, 1)

    # Pass 1: per-segment means (row-tile reduction, resident (S, Dp) accumulator).
    means = pl.pallas_call(
        _seg_mean_kernel,
        out_shape=jax.ShapeDtypeStruct((S, D_pad), jnp.float32),
        grid_spec=pltpu.PrefetchScalarGridSpec(
            num_scalar_prefetch=0,
            grid=(n_tiles,),
            in_specs=[
                pl.BlockSpec((TB, D_pad), lambda t: (t, 0)),   # x tile
                pl.BlockSpec((1, TB), lambda t: (0, t)),       # segment ids (row)
                pl.BlockSpec((S, 1), lambda t: (0, 0)),        # 1/len (resident)
            ],
            out_specs=pl.BlockSpec((S, D_pad), lambda t: (0, 0)),
        ),
        compiler_params=pltpu.CompilerParams(
            dimension_semantics=("arbitrary",)),
    )(x_p, sid_row, invlen)

    # Pass 2: per-tile partial |diff| sums, fully parallel over row tiles.
    partials = pl.pallas_call(
        _l1_partials_kernel,
        out_shape=jax.ShapeDtypeStruct((n_tiles * 8, D_pad), jnp.float32),
        grid_spec=pltpu.PrefetchScalarGridSpec(
            num_scalar_prefetch=0,
            grid=(n_tiles,),
            in_specs=[
                pl.BlockSpec((TB, D_pad), lambda t: (t, 0)),   # x tile
                pl.BlockSpec((TB, 1), lambda t: (t, 0)),       # segment ids (col)
                pl.BlockSpec((S, D_pad), lambda t: (0, 0)),    # means (resident)
            ],
            out_specs=pl.BlockSpec((8, D_pad), lambda t: (t, 0)),
        ),
        compiler_params=pltpu.CompilerParams(
            dimension_semantics=("parallel",)),
    )(x_p, sid_col, means)

    # Finalize in the wrapper (padded rows / lanes contribute exactly zero).
    return jnp.sum(partials) / (N * D)


def _ref_mid_loss(inputs, lengths, loss_type="L2"):
    x = jnp.asarray(inputs, jnp.float32).reshape(inputs.shape[0], -1)
    rows, off = [], 0
    for L in lengths:
        seg = x[off:off + L]
        rows.append(jnp.broadcast_to(jnp.mean(seg, axis=0), (L, x.shape[1])))
        off += L
    mb = jnp.concatenate(rows, axis=0)
    diff = mb - x
    if loss_type == "L1":
        return jnp.mean(jnp.abs(diff))
    return jnp.mean(diff * diff)


if __name__ == "__main__":
    key = jax.random.PRNGKey(0)

    # Small shapes implied by the forward: N rows split into variable-length
    # segments, hidden dim 32.
    lengths = (3, 5, 6, 2, 8)          # N = 24
    N, D = sum(lengths), 32
    inputs = jax.random.normal(key, (N, D), jnp.float32)

    loss_l2 = mid_loss(inputs, lengths, loss_type="L2")
    loss_l1 = mid_loss(inputs, lengths, loss_type="L1")
    jax.block_until_ready((loss_l2, loss_l1))

    ref_l2 = _ref_mid_loss(inputs, lengths, "L2")
    ref_l1 = _ref_mid_loss(inputs, lengths, "L1")
    assert jnp.allclose(loss_l2, ref_l2, rtol=1e-5, atol=1e-6), (loss_l2, ref_l2)
    assert jnp.allclose(loss_l1, ref_l1, rtol=1e-5, atol=1e-6), (loss_l1, ref_l1)

    # TODO(synk): traced/dynamic `lengths` (device tensors) are not supported;
    # segment sizes must be static Python ints, matching torch.split's list API.
    print("KERNEL_OK")
</pallas_src>

<mosaic_0001>
module attributes {stable_mosaic.version = 11 : i64} {
  func.func @_l2_fused_kernel(%arg0: i32, %arg1: memref<128x128xf32, #tpu.memory_space<vmem>>, %arg2: memref<1x128xi32, #tpu.memory_space<vmem>>, %arg3: memref<5x128xf32, #tpu.memory_space<vmem>>, %arg4: memref<8x128xf32, #tpu.memory_space<vmem>>) attributes {dimension_semantics = [#tpu.dimension_semantics<arbitrary>], iteration_bounds = array<i64: 1>, scalar_prefetch = 0 : i64, scratch_operands = 0 : i64, tpu.core_type = #tpu.core_type<tc>, window_params = [{transform_indices = @transform_0, window_bounds = array<i64: 128, 128>}, {transform_indices = @transform_1, window_bounds = array<i64: 1, 128>}, {pipeline_mode = #tpu.pipeline_mode<synchronous>, transform_indices = @transform_2, window_bounds = array<i64: 5, 128>}, {pipeline_mode = #tpu.pipeline_mode<synchronous>, transform_indices = @transform_3, window_bounds = array<i64: 8, 128>}]} {
    %c0_i32 = arith.constant 0 : i32
    %0 = arith.cmpi eq, %arg0, %c0_i32 : i32
    %1 = arith.extui %0 : i1 to i32
    %c0_i32_0 = arith.constant 0 : i32
    %2 = arith.cmpi ne, %1, %c0_i32_0 : i32
    scf.if %2 {
      %cst_12 = arith.constant 0.000000e+00 : f32
      %31 = vector.broadcast %cst_12 : f32 to vector<5x128xf32>
      %c0_13 = arith.constant 0 : index
      %c0_14 = arith.constant 0 : index
      %32 = vector.load %arg3[%c0_13, %c0_14] : memref<5x128xf32, #tpu.memory_space<vmem>>, vector<5x128xf32>
      tpu.vector_store %arg3[%c0_13, %c0_14], %31 {strides = array<i32>} : memref<5x128xf32, #tpu.memory_space<vmem>>, vector<5x128xf32>,
      %cst_15 = arith.constant 0.000000e+00 : f32
      %33 = vector.broadcast %cst_15 : f32 to vector<8x128xf32>
      %c0_16 = arith.constant 0 : index
      %c0_17 = arith.constant 0 : index
      %34 = vector.load %arg4[%c0_16, %c0_17] : memref<8x128xf32, #tpu.memory_space<vmem>>, vector<8x128xf32>
      tpu.vector_store %arg4[%c0_16, %c0_17], %33 {strides = array<i32>} : memref<8x128xf32, #tpu.memory_space<vmem>>, vector<8x128xf32>,
    } else {
    }
    %c0 = arith.constant 0 : index
    %c0_1 = arith.constant 0 : index
    %3 = vector.load %arg1[%c0, %c0_1] : memref<128x128xf32, #tpu.memory_space<vmem>>, vector<128x128xf32>
    %c0_2 = arith.constant 0 : index
    %c0_3 = arith.constant 0 : index
    %4 = vector.load %arg2[%c0_2, %c0_3] : memref<1x128xi32, #tpu.memory_space<vmem>>, vector<1x128xi32>
    %5 = tpu.iota {dimensions = array<i32: 0>} : vector<5x1xi32>
    %6 = vector.broadcast %5 : vector<5x1xi32> to vector<5x128xi32>
    %7 = vector.broadcast %4 : vector<1x128xi32> to vector<5x128xi32>
    %8 = arith.cmpi eq, %6, %7 : vector<5x128xi32>
    %9 = arith.extui %8 : vector<5x128xi1> to vector<5x128xi32>
    %10 = arith.sitofp %9 : vector<5x128xi32> to vector<5x128xf32>
    %c0_4 = arith.constant 0 : index
    %c0_5 = arith.constant 0 : index
    %11 = vector.load %arg3[%c0_4, %c0_5] : memref<5x128xf32, #tpu.memory_space<vmem>>, vector<5x128xf32>
    %cst = arith.constant dense<0.000000e+00> : vector<5x128xf32>
    %12 = tpu.matmul %10, %3, %cst {dimension_numbers = #tpu.dot_dimension_numbers<[1], [0], [0], [1], [0, 0, 1, 1], [], []>} : vector<5x128xf32>, vector<128x128xf32>, vector<5x128xf32> -> vector<5x128xf32>
    %13 = arith.addf %11, %12 : vector<5x128xf32>
    %c0_6 = arith.constant 0 : index
    %c0_7 = arith.constant 0 : index
    %14 = vector.load %arg3[%c0_6, %c0_7] : memref<5x128xf32, #tpu.memory_space<vmem>>, vector<5x128xf32>
    tpu.vector_store %arg3[%c0_6, %c0_7], %13 {strides = array<i32>} : memref<5x128xf32, #tpu.memory_space<vmem>>, vector<5x128xf32>,
    %c0_8 = arith.constant 0 : index
    %c0_9 = arith.constant 0 : index
    %15 = vector.load %arg4[%c0_8, %c0_9] : memref<8x128xf32, #tpu.memory_space<vmem>>, vector<8x128xf32>
    %16 = arith.mulf %3, %3 : vector<128x128xf32>
    %17 = vector.extract_strided_slice %16 {offsets = [0, 0], sizes = [64, 128], strides = [1, 1]} : vector<128x128xf32> to vector<64x128xf32>
    %18 = vector.extract_strided_slice %16 {offsets = [64, 0], sizes = [64, 128], strides = [1, 1]} : vector<128x128xf32> to vector<64x128xf32>
    %19 = arith.addf %17, %18 : vector<64x128xf32>
    %20 = vector.extract_strided_slice %19 {offsets = [0, 0], sizes = [32, 128], strides = [1, 1]} : vector<64x128xf32> to vector<32x128xf32>
    %21 = vector.extract_strided_slice %19 {offsets = [32, 0], sizes = [32, 128], strides = [1, 1]} : vector<64x128xf32> to vector<32x128xf32>
    %22 = arith.addf %20, %21 : vector<32x128xf32>
    %23 = vector.extract_strided_slice %22 {offsets = [0, 0], sizes = [16, 128], strides = [1, 1]} : vector<32x128xf32> to vector<16x128xf32>
    %24 = vector.extract_strided_slice %22 {offsets = [16, 0], sizes = [16, 128], strides = [1, 1]} : vector<32x128xf32> to vector<16x128xf32>
    %25 = arith.addf %23, %24 : vector<16x128xf32>
    %26 = vector.extract_strided_slice %25 {offsets = [0, 0], sizes = [8, 128], strides = [1, 1]} : vector<16x128xf32> to vector<8x128xf32>
    %27 = vector.extract_strided_slice %25 {offsets = [8, 0], sizes = [8, 128], strides = [1, 1]} : vector<16x128xf32> to vector<8x128xf32>
    %28 = arith.addf %26, %27 : vector<8x128xf32>
    %29 = arith.addf %15, %28 : vector<8x128xf32>
    %c0_10 = arith.constant 0 : index
    %c0_11 = arith.constant 0 : index
    %30 = vector.load %arg4[%c0_10, %c0_11] : memref<8x128xf32, #tpu.memory_space<vmem>>, vector<8x128xf32>
    tpu.vector_store %arg4[%c0_10, %c0_11], %29 {strides = array<i32>} : memref<8x128xf32, #tpu.memory_space<vmem>>, vector<8x128xf32>,
    return
  }
  func.func @transform_0(%arg0: i32) -> (i32, i32) {
    %c0_i32 = arith.constant 0 : i32
    %c0_i32_0 = arith.constant 0 : i32
    return %arg0, %c0_i32 : i32, i32
  }
  func.func @transform_1(%arg0: i32) -> (i32, i32) {
    %c0_i32 = arith.constant 0 : i32
    %c0_i32_0 = arith.constant 0 : i32
    return %c0_i32, %arg0 : i32, i32
  }
  func.func @transform_2(%arg0: i32) -> (i32, i32) {
    %c0_i32 = arith.constant 0 : i32
    %c0_i32_0 = arith.constant 0 : i32
    %c0_i32_1 = arith.constant 0 : i32
    return %c0_i32, %c0_i32_0 : i32, i32
  }
  func.func @transform_3(%arg0: i32) -> (i32, i32) {
    %c0_i32 = arith.constant 0 : i32
    %c0_i32_0 = arith.constant 0 : i32
    %c0_i32_1 = arith.constant 0 : i32
    return %c0_i32, %c0_i32_0 : i32, i32
  }
}

</mosaic_0001>

<llo_original>
// kernel: tpu_custom_call.1
$region0: #{tpu_custom_call.1}
  #allocation0 [shape = 'u32[]', space=smem, size = 0x4, offset = 0x4, fixed_abs, tag = 'smem constant byte address 0x4 - core index']
  #allocation1 [shape = 'u32[144,128]{1,0:T(1,128)}', space=vmem, size = 0x12000, scoped, tag = 'internal scratch']
  %s0 = inlined_call_operand.hbm [shape: f32[128,128], index: 0, kind: input, shape index: {}]
  %s1 = inlined_call_operand.vmem [shape: s32[1,128], index: 1, kind: input, shape index: {}]
  %s2 = inlined_call_operand.hbm [shape: f32[5,128], index: 2, kind: output, shape index: {0}]
  %s3 = inlined_call_operand.hbm [shape: f32[8,128], index: 3, kind: output, shape index: {1}]
  %4 = xla_tuple %s2, %s3
  %s5 = sld [smem:[#allocation0]]
  $region34: #{tpu_custom_call.1} parent=0
    _
  %s7 = ssub.s32 1, %s5
  %s8 = scalar_select 0, %s7, %s5
  $region1: #{tpu_custom_call.1} parent=0
    #allocation2 [shape = 'u8[65536]{0}', space=vmem, size = 0x10000, scoped, tag = 'input window, operand 0, single buffered']
    #allocation3 [shape = 's32[1]{0}', space=sflag, size = 0x4, scoped, tag = 'scoped memory for tpu_custom_call.1']
    #allocation4 [shape = 's32[1]{0}', space=sflag, size = 0x4, scoped, tag = 'scoped memory for tpu_custom_call.1']
    #allocation5 [shape = 'u8[4096]{0}', space=vmem, size = 0x1000, scoped, tag = 'output window, operand 0, single buffered']
    #allocation6 [shape = 'u8[4096]{0}', space=vmem, size = 0x1000, scoped, tag = 'output window, operand 1, single buffered']
    #allocation7 [shape = 's32[1]{0}', space=sflag, size = 0x4, scoped, tag = 'scoped memory for tpu_custom_call.1']
    %9 = vsyncpa [#allocation3], 0
    %10 = vsyncpa [#allocation4], 0
    %11 = vsyncpa [#allocation7], 0
    // Predicated region
    $region2: #{tpu_custom_call.1} parent=1 // pred_check
      _
    $region3: #{tpu_custom_call.1} parent=1 // pred_check_branch
      %13 = sbr.rel (0) target = $region5
    $region4: #{tpu_custom_call.1} parent=1 // pred_region
      %s15 = ssub.s32 2048, 2048
      %16 = vsyncadd [#allocation3], %s15
      %s17 = sshll.u32 [#allocation2], 4
      %s18 = int_to_ptr.vmem [resolvable:$true] %s17
      %23 = dma.hbm_to_vmem [thread:$0]  %s0, 2048, %s18, [#allocation3], 128, 128, 8
    $region5: #{tpu_custom_call.1} parent=1 // pred_fallthru
      _
    // Predicated region
    $region6: #{tpu_custom_call.1} parent=1 // pred_check
      _
    $region7: #{tpu_custom_call.1} parent=1 // pred_check_branch
      %25 = sbr.rel (0) target = $region9
    $region8: #{tpu_custom_call.1} parent=1 // pred_region
      _
    $region9: #{tpu_custom_call.1} parent=1 // pred_fallthru
      _
    // Predicated region
    $region10: #{tpu_custom_call.1} parent=1 // pred_check
      _
    $region11: #{tpu_custom_call.1} parent=1 // pred_check_branch
      %27 = sbr.rel (0) target = $region13
    $region12: #{tpu_custom_call.1} parent=1 // pred_region
      %28 = dma.done [#allocation3], 2048
    $region13: #{tpu_custom_call.1} parent=1 // pred_fallthru
      _
    %p29 = scmp.eq.s32.totalorder 0, 0
    // Predicated region
    $region14: #{tpu_custom_call.1} parent=1 // pred_check
      %p30 = pneg %p29
    $region15: #{tpu_custom_call.1} parent=1 // pred_check_branch
      %32 = sbr.rel (%p30) target = $region17
    $region16: #{tpu_custom_call.1} parent=1 // pred_region
      %33 = vst [vmem:[#allocation5] sm:$0x1f] 0.0
      %34 = vst [vmem:[#allocation6] sm:$0xff] 0.0
    $region17: #{tpu_custom_call.1} parent=1 // pred_fallthru
      _
    %v35 = vld [vmem:[#allocation2] sm:$0xff]
    %v36 = vld [vmem:[#allocation2 + $0x8] sm:$0xff]
    %v37 = vld [vmem:[#allocation2 + $0x10] sm:$0xff]
    %v38 = vld [vmem:[#allocation2 + $0x18] sm:$0xff]
    %v39 = vld [vmem:[#allocation2 + $0x20] sm:$0xff]
    %v40 = vld [vmem:[#allocation2 + $0x28] sm:$0xff]
    %v41 = vld [vmem:[#allocation2 + $0x30] sm:$0xff]
    %v42 = vld [vmem:[#allocation2 + $0x38] sm:$0xff]
    %v43 = vld [vmem:[#allocation2 + $0x40] sm:$0xff]
    %v44 = vld [vmem:[#allocation2 + $0x48] sm:$0xff]
    %v45 = vld [vmem:[#allocation2 + $0x50] sm:$0xff]
    %v46 = vld [vmem:[#allocation2 + $0x58] sm:$0xff]
    %v47 = vld [vmem:[#allocation2 + $0x60] sm:$0xff]
    %v48 = vld [vmem:[#allocation2 + $0x68] sm:$0xff]
    %v49 = vld [vmem:[#allocation2 + $0x70] sm:$0xff]
    %v50 = vld [vmem:[#allocation2 + $0x78] sm:$0xff]
    %v51 = vld [vmem:[%s1] sm:$0x1]
    %v52 = vlaneseq
    %v53 = vshrl.u32 %v52, 7
    %v54 = vlaneseq
    %v55 = vshrl.u32 %v54, 7
    %v56 = vsub.s32 0, %v55
    %v57 = vrot.slane %v51, %v56
    %vm58 = vcmp.eq.s32.totalorder %v53, %v57
    %v59 = vsel %vm58, 1, 0
    %v60 = vcvt.s32.f32 %v59
    %v61 = vld [vmem:[#allocation5] sm:$0x1f]
    %62 = vmatprep.subr.mxu0 0.0
    %63 = vmatpush1.msra.mxu0 %v50
    %64 = vmatprep.subr.mxu0 0.0
    %65 = vmatpush1.msra.mxu0 %v49
    %66 = vmatprep.subr.mxu0 0.0
    %67 = vmatpush1.msra.mxu0 %v48
    %68 = vmatprep.subr.mxu0 0.0
    %69 = vmatpush1.msra.mxu0 %v47
    %70 = vmatprep.subr.mxu0 0.0
    %71 = vmatpush1.msra.mxu0 %v46
    %72 = vmatprep.subr.mxu0 0.0
    %73 = vmatpush1.msra.mxu0 %v45
    %74 = vmatprep.subr.mxu0 0.0
    %75 = vmatpush1.msra.mxu0 %v44
    %76 = vmatprep.subr.mxu0 0.0
    %77 = vmatpush1.msra.mxu0 %v43
    %78 = vmatprep.subr.mxu0 0.0
    %79 = vmatpush1.msra.mxu0 %v42
    %80 = vmatprep.subr.mxu0 0.0
    %81 = vmatpush1.msra.mxu0 %v41
    %82 = vmatprep.subr.mxu0 0.0
    %83 = vmatpush1.msra.mxu0 %v40
    %84 = vmatprep.subr.mxu0 0.0
    %85 = vmatpush1.msra.mxu0 %v39
    %86 = vmatprep.subr.mxu0 0.0
    %87 = vmatpush1.msra.mxu0 %v38
    %88 = vmatprep.subr.mxu0 0.0
    %89 = vmatpush1.msra.mxu0 %v37
    %90 = vmatprep.subr.mxu0 0.0
    %91 = vmatpush1.msra.mxu0 %v36
    %92 = vmatprep.subr.mxu0 0.0
    %93 = vmatpush1.msra.mxu0 %v35
    %94 = vmatprep.subr.mxu0 0.0
    %95 = vmatpush2.msra.mxu0 0.0
    %96 = vmatprep.subr.mxu0 0.0
    %97 = vmatpush2.msra.mxu0 0.0
    %98 = vmatprep.subr.mxu0 0.0
    %99 = vmatpush2.msra.mxu0 0.0
    %100 = vmatprep.subr.mxu0 0.0
    %101 = vmatpush2.msra.mxu0 0.0
    %102 = vmatprep.subr.mxu0 0.0
    %103 = vmatpush2.msra.mxu0 0.0
    %104 = vmatprep.subr.mxu0 0.0
    %105 = vmatpush2.msra.mxu0 0.0
    %106 = vmatprep.subr.mxu0 0.0
    %107 = vmatpush2.msra.mxu0 0.0
    %108 = vmatprep.subr.mxu0 0.0
    %109 = vmatpush2.msra.mxu0 0.0
    %110 = vmatprep.subr.mxu0 0.0
    %111 = vmatpush2.msra.mxu0 0.0
    %112 = vmatprep.subr.mxu0 0.0
    %113 = vmatpush2.msra.mxu0 0.0
    %114 = vmatprep.subr.mxu0 0.0
    %115 = vmatpush2.msra.mxu0 0.0
    %116 = vmatprep.subr.mxu0 0.0
    %117 = vmatpush2.msra.mxu0 0.0
    %118 = vmatprep.subr.mxu0 0.0
    %119 = vmatpush2.msra.mxu0 0.0
    %120 = vmatprep.subr.mxu0 0.0
    %121 = vmatpush2.msra.mxu0 0.0
    %122 = vmatprep.subr.mxu0 0.0
    %123 = vmatpush2.msra.mxu0 0.0
    %124 = vmatprep.subr.mxu0 0.0
    %125 = vmatpush2.msra.mxu0 0.0
    %126 = vmatprep.mubr.f32.mxu0 0.0
    %127 = vmatmul.mubr.f32.gmra.mxu0 %v60
    %v128 = vpop.f32.mrf.mxu0
    %v129 = vadd.f32 0.0, %v128
    %v130 = vpop.f32.mrf.mxu0
    %131 = vdwg.mxu0
    %v132 = vadd.f32 %v61, %v129
    %133 = vst [vmem:[#allocation5] sm:$0x1f] %v132
    %v134 = vld [vmem:[#allocation6] sm:$0xff]
    %v135 = vmul.f32 %v35, %v35
    %v136 = vmul.f32 %v36, %v36
    %v137 = vmul.f32 %v37, %v37
    %v138 = vmul.f32 %v38, %v38
    %v139 = vmul.f32 %v39, %v39
    %v140 = vmul.f32 %v40, %v40
    %v141 = vmul.f32 %v41, %v41
    %v142 = vmul.f32 %v42, %v42
    %v143 = vmul.f32 %v43, %v43
    %v144 = vmul.f32 %v44, %v44
    %v145 = vmul.f32 %v45, %v45
    %v146 = vmul.f32 %v46, %v46
    %v147 = vmul.f32 %v47, %v47
    %v148 = vmul.f32 %v48, %v48
    %v149 = vmul.f32 %v49, %v49
    %v150 = vmul.f32 %v50, %v50
    %v151 = vadd.f32 %v135, %v143
    %v152 = vadd.f32 %v136, %v144
    %v153 = vadd.f32 %v137, %v145
    %v154 = vadd.f32 %v138, %v146
    %v155 = vadd.f32 %v139, %v147
    %v156 = vadd.f32 %v140, %v148
    %v157 = vadd.f32 %v141, %v149
    %v158 = vadd.f32 %v142, %v150
    %v159 = vadd.f32 %v151, %v155
    %v160 = vadd.f32 %v152, %v156
    %v161 = vadd.f32 %v153, %v157
    %v162 = vadd.f32 %v154, %v158
    %v163 = vadd.f32 %v159, %v161
    %v164 = vadd.f32 %v160, %v162
    %v165 = vadd.f32 %v163, %v164
    %v166 = vadd.f32 %v134, %v165
    %167 = vst [vmem:[#allocation6] sm:$0xff] %v166
    // Predicated region
    $region18: #{tpu_custom_call.1} parent=1 // pred_check
      _
    $region19: #{tpu_custom_call.1} parent=1 // pred_check_branch
      %169 = sbr.rel (0) target = $region21
    $region20: #{tpu_custom_call.1} parent=1 // pred_region
      %s171 = ssub.s32 128, 128
      %172 = vsyncadd [#allocation4], %s171
      %s174 = sshll.u32 [#allocation5], 4
      %s175 = int_to_ptr.vmem [resolvable:$true] %s174
      %177 = dma.vmem_to_hbm [thread:$0]  %s175, 128, %s2, [#allocation4]
    $region21: #{tpu_custom_call.1} parent=1 // pred_fallthru
      _
    // Predicated region
    $region22: #{tpu_custom_call.1} parent=1 // pred_check
      _
    $region23: #{tpu_custom_call.1} parent=1 // pred_check_branch
      %179 = sbr.rel (0) target = $region25
    $region24: #{tpu_custom_call.1} parent=1 // pred_region
      %s181 = ssub.s32 128, 128
      %182 = vsyncadd [#allocation7], %s181
      %s184 = sshll.u32 [#allocation6], 4
      %s185 = int_to_ptr.vmem [resolvable:$true] %s184
      %187 = dma.vmem_to_hbm [thread:$0]  %s185, 128, %s3, [#allocation7]
    $region25: #{tpu_custom_call.1} parent=1 // pred_fallthru
      _
    // Predicated region
    $region26: #{tpu_custom_call.1} parent=1 // pred_check
      _
    $region27: #{tpu_custom_call.1} parent=1 // pred_check_branch
      %189 = sbr.rel (0) target = $region29
    $region28: #{tpu_custom_call.1} parent=1 // pred_region
      %190 = dma.done [#allocation4], 128
    $region29: #{tpu_custom_call.1} parent=1 // pred_fallthru
      _
    // Predicated region
    $region30: #{tpu_custom_call.1} parent=1 // pred_check
      _
    $region31: #{tpu_custom_call.1} parent=1 // pred_check_branch
      %192 = sbr.rel (0) target = $region33
    $region32: #{tpu_custom_call.1} parent=1 // pred_region
      %193 = dma.done [#allocation7], 128
    $region33: #{tpu_custom_call.1} parent=1 // pred_fallthru
      _
    %194 = vsyncpa [#allocation3], 1
    %195 = vsyncpa [#allocation4], 1
    %196 = vsyncpa [#allocation7], 1

</llo_original>
